<compile_context>
chip_gen: v7x
topology: tpu7x:2x2x1
jax: 0.10.0
libtpu: 0.0.40
codegen_flags: <defaults>
</compile_context>

<pallas_src>
import jax
import jax.numpy as jnp
from jax.experimental import pallas as pl
from jax.experimental.pallas import tpu as pltpu

_LANE = 128


# --------------------------------------------------------------------------- #
# Kernel body (shared by both layouts): y = W @ x + b, one MXU push per step.
# --------------------------------------------------------------------------- #
def _affine_kernel(w_ref, b_ref, x_ref, y_ref):
    # w: (out_seq, in_seq) in x.dtype (resident), b: (out_seq, 1) f32 (resident)
    # x: (in_seq, tile),   y: (out_seq, tile)
    acc = jnp.dot(w_ref[...], x_ref[...], preferred_element_type=jnp.float32)
    y_ref[...] = (acc + b_ref[...]).astype(y_ref.dtype)


# --------------------------------------------------------------------------- #
# Affine-chain pre-composition (valid because there is no nonlinearity between
# the Linear layers in the original module).
# --------------------------------------------------------------------------- #
def _compose_affine(weights, biases):
    w_eff = weights[0].astype(jnp.float32)
    b_eff = biases[0].astype(jnp.float32)
    for w, b in zip(weights[1:], biases[1:]):
        w32 = w.astype(jnp.float32)
        w_eff = w32 @ w_eff
        b_eff = w32 @ b_eff + b.astype(jnp.float32)
    return w_eff, b_eff


# --------------------------------------------------------------------------- #
# Generation-dependent VMEM budgets.
# --------------------------------------------------------------------------- #
def _vmem_budgets(resident_weight_bytes):
    try:
        cap = int(pltpu.get_tpu_info().vmem_capacity_bytes)
    except Exception:
        cap = 64 * 1024 * 1024  # conservative default (v7x-sized) if query fails
    vmem_limit = min(cap * 3 // 4, 100 * 1024 * 1024)  # 48 MiB (64 MiB parts), 96 MiB (128 MiB parts)
    slack = 4 * 1024 * 1024  # compiler-internal scratch / semaphores headroom
    block_budget = max(vmem_limit - 2 * resident_weight_bytes - slack, 2 * 1024 * 1024)
    return block_budget, vmem_limit


def _pick_lane_tile(n_pad, rows_in, rows_out, itemsize, budget):
    """Largest lane tile (multiple of 128 dividing n_pad) whose double-buffered
    in+out blocks fit `budget`; prefer >=2 grid steps so both v7x TCs get work."""
    per_col = (rows_in + rows_out) * itemsize * 2  # in + out blocks, double-buffered
    fitting = [c for c in (4096, 2048, 1024, 512, 256, 128)
               if n_pad % c == 0 and c * per_col <= budget]
    if not fitting:
        return _LANE  # correctness fallback (only hit for enormous in_seq)
    multi = [c for c in fitting if n_pad // c >= 2]
    return multi[0] if multi else fitting[0]


def _pick_channel_tile(C, rows_in, rows_out, itemsize, budget):
    """Channel tile for the permute-free path (C is a multiple of 128)."""
    per_col = (rows_in + rows_out) * itemsize * 2
    if C * per_col <= budget:
        return C  # whole channel axis: fully contiguous DMA rows per (b, i)
    fitting = [c for c in (2048, 1024, 512, 256, 128)
               if C % c == 0 and c * per_col <= budget]
    return fitting[0] if fitting else _LANE


# --------------------------------------------------------------------------- #
# Path A: C % 128 == 0 -> keep (B, seq, C) layout end-to-end (no permute pass).
# --------------------------------------------------------------------------- #
def _forward_channels_aligned(x, w, b, out_seq, budget, vmem_limit, cost):
    B, in_seq, C = x.shape
    itemsize = jnp.dtype(x.dtype).itemsize
    ct = _pick_channel_tile(C, in_seq, out_seq, itemsize, budget)
    grid = (B, C // ct)
    return pl.pallas_call(
        _affine_kernel,
        out_shape=jax.ShapeDtypeStruct((B, out_seq, C), x.dtype),
        grid_spec=pltpu.PrefetchScalarGridSpec(
            num_scalar_prefetch=0,
            grid=grid,
            in_specs=[
                pl.BlockSpec((out_seq, in_seq), lambda bi, ci: (0, 0)),  # resident
                pl.BlockSpec((out_seq, 1), lambda bi, ci: (0, 0)),       # resident
                pl.BlockSpec((None, in_seq, ct), lambda bi, ci: (bi, 0, ci)),
            ],
            out_specs=pl.BlockSpec((None, out_seq, ct), lambda bi, ci: (bi, 0, ci)),
        ),
        compiler_params=pltpu.CompilerParams(
            dimension_semantics=("parallel", "parallel"),
            vmem_limit_bytes=vmem_limit,
        ),
        cost_estimate=cost,
    )(w, b, x)


# --------------------------------------------------------------------------- #
# Path B: small / unaligned C -> lane-dense 2-D slab (in_seq, B*C padded to 128).
# --------------------------------------------------------------------------- #
def _forward_lane_dense(x, w, b, out_seq, budget, vmem_limit, cost):
    B, in_seq, C = x.shape
    itemsize = jnp.dtype(x.dtype).itemsize
    N = B * C
    n_pad = ((N + _LANE - 1) // _LANE) * _LANE
    # (B, in_seq, C) -> (in_seq, B*C): one XLA permute pass, repaid by fully
    # lane-dense (unmasked) loads/stores inside the kernel.
    x2 = jnp.transpose(x, (1, 0, 2)).reshape(in_seq, N)
    if n_pad != N:
        x2 = jnp.pad(x2, ((0, 0), (0, n_pad - N)))

    nt = _pick_lane_tile(n_pad, in_seq, out_seq, itemsize, budget)
    grid = (n_pad // nt,)
    y2 = pl.pallas_call(
        _affine_kernel,
        out_shape=jax.ShapeDtypeStruct((out_seq, n_pad), x.dtype),
        grid_spec=pltpu.PrefetchScalarGridSpec(
            num_scalar_prefetch=0,
            grid=grid,
            in_specs=[
                pl.BlockSpec((out_seq, in_seq), lambda i: (0, 0)),  # resident
                pl.BlockSpec((out_seq, 1), lambda i: (0, 0)),       # resident
                pl.BlockSpec((in_seq, nt), lambda i: (0, i)),
            ],
            out_specs=pl.BlockSpec((out_seq, nt), lambda i: (0, i)),
        ),
        compiler_params=pltpu.CompilerParams(
            dimension_semantics=("parallel",),
            vmem_limit_bytes=vmem_limit,
        ),
        cost_estimate=cost,
    )(w, b, x2)
    y = y2[:, :N].reshape(out_seq, B, C)
    return jnp.transpose(y, (1, 0, 2))


# --------------------------------------------------------------------------- #
# Public wrapper: JAX/Pallas equivalent of ODEFunc.forward(t, x).
# --------------------------------------------------------------------------- #
def odefunc_forward(t, x, weights, biases):
    del t  # the ODE time argument is unused by the module's forward (kept for parity)
    B, in_seq, C = x.shape
    n_layers = len(weights)
    assert len(biases) == n_layers
    assert weights[0].shape[1] == in_seq
    out_seq = int(weights[-1].shape[0])

    # Fold the affine chain into a single matmul (no nonlinearity in the module).
    w_eff, b_eff = _compose_affine(weights, biases)
    w_mxu = w_eff.astype(x.dtype)            # MXU consumes bf16/f32 natively
    b_col = b_eff.reshape(out_seq, 1)        # f32, added to the f32 accumulator

    itemsize = jnp.dtype(x.dtype).itemsize
    resident_bytes = int(w_mxu.size) * itemsize + int(b_col.size) * 4
    block_budget, vmem_limit = _vmem_budgets(resident_bytes)

    flops = 2 * out_seq * in_seq * B * C
    bytes_accessed = B * C * (in_seq + out_seq) * itemsize + resident_bytes
    cost = pl.CostEstimate(flops=int(flops), transcendentals=0,
                           bytes_accessed=int(bytes_accessed))

    if C % _LANE == 0:
        return _forward_channels_aligned(x, w_mxu, b_col, out_seq,
                                         block_budget, vmem_limit, cost)
    return _forward_lane_dense(x, w_mxu, b_col, out_seq,
                               block_budget, vmem_limit, cost)


# --------------------------------------------------------------------------- #
# Pure-JAX reference (mirrors the PyTorch forward, layer by layer) & init.
# --------------------------------------------------------------------------- #
def _reference(x, weights, biases):
    h = jnp.transpose(x, (0, 2, 1))            # (B, C, in_seq)
    for w, b in zip(weights, biases):
        h = h @ w.T + b                        # nn.Linear on the last dim
    return jnp.transpose(h, (0, 2, 1))         # (B, out_seq, C)


def _init_params(key, in_seq, out_seq, n_layers):
    """Mirror ODEFunc.__init__: (n_layers-1) x Linear(in,in) then Linear(in,out)."""
    dims = [(in_seq, in_seq)] * (n_layers - 1) + [(in_seq, out_seq)]
    weights, biases = [], []
    for d_in, d_out in dims:
        key, kw, kb = jax.random.split(key, 3)
        bound = 1.0 / (d_in ** 0.5)
        weights.append(jax.random.uniform(kw, (d_out, d_in), jnp.float32, -bound, bound))
        biases.append(jax.random.uniform(kb, (d_out,), jnp.float32, -bound, bound))
    return weights, biases


if __name__ == "__main__":
    key = jax.random.PRNGKey(0)

    def run_case(case_key, B, in_seq, out_seq, C, n_layers):
        kx, kp = jax.random.split(case_key)
        x = jax.random.normal(kx, (B, in_seq, C), dtype=jnp.float32)
        weights, biases = _init_params(kp, in_seq, out_seq, n_layers)
        t = jnp.zeros(())  # ODE time argument; unused by the forward
        y = jax.block_until_ready(odefunc_forward(t, x, weights, biases))
        y_ref = _reference(x, weights, biases)
        assert y.shape == (B, out_seq, C)
        assert jnp.allclose(y, y_ref, atol=1e-5, rtol=1e-5), float(
            jnp.max(jnp.abs(y - y_ref)))

    k1, k2 = jax.random.split(key)
    # Small-channel case (C not a multiple of 128) -> lane-dense 2-D path.
    run_case(k1, B=2, in_seq=16, out_seq=8, C=4, n_layers=2)
    # Lane-aligned case (C % 128 == 0) -> permute-free path (also checks 3-layer chain).
    run_case(k2, B=2, in_seq=16, out_seq=8, C=128, n_layers=3)

    print("KERNEL_OK")
</pallas_src>

<mosaic_0001>
module attributes {stable_mosaic.version = 11 : i64} {
  func.func @_affine_kernel(%arg0: i32, %arg1: memref<8x16xf32, #tpu.memory_space<vmem>>, %arg2: memref<8x1xf32, #tpu.memory_space<vmem>>, %arg3: memref<16x128xf32, #tpu.memory_space<vmem>>, %arg4: memref<8x128xf32, #tpu.memory_space<vmem>>) attributes {dimension_semantics = [#tpu.dimension_semantics<parallel>], iteration_bounds = array<i64: 1>, scalar_prefetch = 0 : i64, scratch_operands = 0 : i64, tpu.core_type = #tpu.core_type<tc>, window_params = [{pipeline_mode = #tpu.pipeline_mode<synchronous>, transform_indices = @transform_0, window_bounds = array<i64: 8, 16>}, {pipeline_mode = #tpu.pipeline_mode<synchronous>, transform_indices = @transform_1, window_bounds = array<i64: 8, 1>}, {transform_indices = @transform_2, window_bounds = array<i64: 16, 128>}, {transform_indices = @transform_3, window_bounds = array<i64: 8, 128>}]} {
    %c0 = arith.constant 0 : index
    %c0_0 = arith.constant 0 : index
    %0 = vector.load %arg1[%c0, %c0_0] : memref<8x16xf32, #tpu.memory_space<vmem>>, vector<8x16xf32>
    %c0_1 = arith.constant 0 : index
    %c0_2 = arith.constant 0 : index
    %1 = vector.load %arg3[%c0_1, %c0_2] : memref<16x128xf32, #tpu.memory_space<vmem>>, vector<16x128xf32>
    %cst = arith.constant dense<0.000000e+00> : vector<8x128xf32>
    %2 = tpu.matmul %0, %1, %cst {dimension_numbers = #tpu.dot_dimension_numbers<[1], [0], [0], [1], [0, 0, 1, 1], [], []>} : vector<8x16xf32>, vector<16x128xf32>, vector<8x128xf32> -> vector<8x128xf32>
    %c0_3 = arith.constant 0 : index
    %c0_4 = arith.constant 0 : index
    %3 = vector.load %arg2[%c0_3, %c0_4] : memref<8x1xf32, #tpu.memory_space<vmem>>, vector<8x1xf32>
    %4 = vector.broadcast %3 : vector<8x1xf32> to vector<8x128xf32>
    %5 = arith.addf %2, %4 : vector<8x128xf32>
    %c0_5 = arith.constant 0 : index
    %c0_6 = arith.constant 0 : index
    %6 = vector.load %arg4[%c0_5, %c0_6] : memref<8x128xf32, #tpu.memory_space<vmem>>, vector<8x128xf32>
    tpu.vector_store %arg4[%c0_5, %c0_6], %5 {strides = array<i32>} : memref<8x128xf32, #tpu.memory_space<vmem>>, vector<8x128xf32>,
    return
  }
  func.func @transform_0(%arg0: i32) -> (i32, i32) {
    %c0_i32 = arith.constant 0 : i32
    %c0_i32_0 = arith.constant 0 : i32
    %c0_i32_1 = arith.constant 0 : i32
    return %c0_i32, %c0_i32_0 : i32, i32
  }
  func.func @transform_1(%arg0: i32) -> (i32, i32) {
    %c0_i32 = arith.constant 0 : i32
    %c0_i32_0 = arith.constant 0 : i32
    %c0_i32_1 = arith.constant 0 : i32
    return %c0_i32, %c0_i32_0 : i32, i32
  }
  func.func @transform_2(%arg0: i32) -> (i32, i32) {
    %c0_i32 = arith.constant 0 : i32
    %c0_i32_0 = arith.constant 0 : i32
    return %c0_i32, %arg0 : i32, i32
  }
  func.func @transform_3(%arg0: i32) -> (i32, i32) {
    %c0_i32 = arith.constant 0 : i32
    %c0_i32_0 = arith.constant 0 : i32
    return %c0_i32, %arg0 : i32, i32
  }
}

</mosaic_0001>

<llo_original>
// kernel: tpu_custom_call.1
$region0: #{tpu_custom_call.1}
  #allocation0 [shape = 'u32[]', space=smem, size = 0x4, offset = 0x4, fixed_abs, tag = 'smem constant byte address 0x4 - core index']
  #allocation1 [shape = 'u32[144,128]{1,0:T(1,128)}', space=vmem, size = 0x12000, scoped, tag = 'internal scratch']
  %s0 = inlined_call_operand.hbm [shape: f32[8,16], index: 0, kind: input, shape index: {}]
  %s1 = inlined_call_operand.vmem [shape: f32[8,1], index: 1, kind: input, shape index: {}]
  %s2 = inlined_call_operand.vmem [shape: f32[16,128], index: 2, kind: input, shape index: {}]
  %s3 = inlined_call_operand.hbm [shape: f32[8,128], index: 3, kind: output, shape index: {}]
  %s4 = sld [smem:[#allocation0]]
  $region26: #{tpu_custom_call.1} parent=0
    _
  %s6 = ssub.s32 1, %s4
  %s7 = scalar_select 0, %s6, %s4
  $region1: #{tpu_custom_call.1} parent=0
    #allocation2 [shape = 'u8[4096]{0}', space=vmem, size = 0x1000, scoped, tag = 'input window, operand 0, single buffered']
    #allocation3 [shape = 's32[1]{0}', space=sflag, size = 0x4, scoped, tag = 'scoped memory for tpu_custom_call.1']
    #allocation4 [shape = 's32[1]{0}', space=sflag, size = 0x4, scoped, tag = 'scoped memory for tpu_custom_call.1']
    #allocation5 [shape = 'u8[4096]{0}', space=vmem, size = 0x1000, scoped, tag = 'output window, operand 0, single buffered']
    %8 = vsyncpa [#allocation3], 0
    %9 = vsyncpa [#allocation4], 0
    // Predicated region
    $region2: #{tpu_custom_call.1} parent=1 // pred_check
      _
    $region3: #{tpu_custom_call.1} parent=1 // pred_check_branch
      %11 = sbr.rel (0) target = $region5
    $region4: #{tpu_custom_call.1} parent=1 // pred_region
      %s13 = ssub.s32 128, 128
      %14 = vsyncadd [#allocation3], %s13
      %s16 = sshll.u32 [#allocation2], 4
      %s17 = int_to_ptr.vmem [resolvable:$true] %s16
      %19 = dma.hbm_to_vmem [thread:$0]  %s0, 128, %s17, [#allocation3]
    $region5: #{tpu_custom_call.1} parent=1 // pred_fallthru
      _
    // Predicated region
    $region6: #{tpu_custom_call.1} parent=1 // pred_check
      _
    $region7: #{tpu_custom_call.1} parent=1 // pred_check_branch
      %21 = sbr.rel (0) target = $region9
    $region8: #{tpu_custom_call.1} parent=1 // pred_region
      _
    $region9: #{tpu_custom_call.1} parent=1 // pred_fallthru
      _
    // Predicated region
    $region10: #{tpu_custom_call.1} parent=1 // pred_check
      _
    $region11: #{tpu_custom_call.1} parent=1 // pred_check_branch
      %23 = sbr.rel (0) target = $region13
    $region12: #{tpu_custom_call.1} parent=1 // pred_region
      _
    $region13: #{tpu_custom_call.1} parent=1 // pred_fallthru
      _
    // Predicated region
    $region14: #{tpu_custom_call.1} parent=1 // pred_check
      _
    $region15: #{tpu_custom_call.1} parent=1 // pred_check_branch
      %25 = sbr.rel (0) target = $region17
    $region16: #{tpu_custom_call.1} parent=1 // pred_region
      %26 = dma.done [#allocation3], 128
    $region17: #{tpu_custom_call.1} parent=1 // pred_fallthru
      _
    %v27 = vld [vmem:[#allocation2] sm:$0xff]
    %v28 = vld [vmem:[%s2] sm:$0xff]
    %v29 = vld [vmem:[%s2 + $0x8] sm:$0xff]
    %v30 = vld [vmem:[%s1] sm:$0xff]
    %32 = vset.pattern.permute.xlu0 0
    %33 = vperm.xlu0 %32, %v30
    %v34 = vpop.permute.xlu0 %33
    %vm36 = vcmask 130048
    %v38 = vsel %vm36, %v27, 0
    %40 = vmatprep.subr.mxu0 0.0
    %41 = vmatpush1.msra.mxu0 %v28
    %42 = vmatprep.subr.mxu0 0.0
    %43 = vmatpush1.msra.mxu0 %v29
    %44 = vmatprep.subr.mxu0 0.0
    %45 = vmatpush1.msra.mxu0 0.0
    %46 = vmatprep.subr.mxu0 0.0
    %47 = vmatpush1.msra.mxu0 0.0
    %48 = vmatprep.subr.mxu0 0.0
    %49 = vmatpush1.msra.mxu0 0.0
    %50 = vmatprep.subr.mxu0 0.0
    %51 = vmatpush1.msra.mxu0 0.0
    %52 = vmatprep.subr.mxu0 0.0
    %53 = vmatpush1.msra.mxu0 0.0
    %54 = vmatprep.subr.mxu0 0.0
    %55 = vmatpush1.msra.mxu0 0.0
    %56 = vmatprep.subr.mxu0 0.0
    %57 = vmatpush1.msra.mxu0 0.0
    %58 = vmatprep.subr.mxu0 0.0
    %59 = vmatpush1.msra.mxu0 0.0
    %60 = vmatprep.subr.mxu0 0.0
    %61 = vmatpush1.msra.mxu0 0.0
    %62 = vmatprep.subr.mxu0 0.0
    %63 = vmatpush1.msra.mxu0 0.0
    %64 = vmatprep.subr.mxu0 0.0
    %65 = vmatpush1.msra.mxu0 0.0
    %66 = vmatprep.subr.mxu0 0.0
    %67 = vmatpush1.msra.mxu0 0.0
    %68 = vmatprep.subr.mxu0 0.0
    %69 = vmatpush1.msra.mxu0 0.0
    %70 = vmatprep.subr.mxu0 0.0
    %71 = vmatpush1.msra.mxu0 0.0
    %72 = vmatprep.subr.mxu0 0.0
    %73 = vmatpush1.msra.mxu0 0.0
    %74 = vmatprep.subr.mxu0 0.0
    %75 = vmatpush1.msra.mxu0 0.0
    %76 = vmatprep.subr.mxu0 0.0
    %77 = vmatpush1.msra.mxu0 0.0
    %78 = vmatprep.subr.mxu0 0.0
    %79 = vmatpush1.msra.mxu0 0.0
    %80 = vmatprep.subr.mxu0 0.0
    %81 = vmatpush1.msra.mxu0 0.0
    %82 = vmatprep.subr.mxu0 0.0
    %83 = vmatpush1.msra.mxu0 0.0
    %84 = vmatprep.subr.mxu0 0.0
    %85 = vmatpush1.msra.mxu0 0.0
    %86 = vmatprep.subr.mxu0 0.0
    %87 = vmatpush1.msra.mxu0 0.0
    %88 = vmatprep.subr.mxu0 0.0
    %89 = vmatpush1.msra.mxu0 0.0
    %90 = vmatprep.subr.mxu0 0.0
    %91 = vmatpush1.msra.mxu0 0.0
    %92 = vmatprep.subr.mxu0 0.0
    %93 = vmatpush1.msra.mxu0 0.0
    %94 = vmatprep.subr.mxu0 0.0
    %95 = vmatpush1.msra.mxu0 0.0
    %96 = vmatprep.subr.mxu0 0.0
    %97 = vmatpush1.msra.mxu0 0.0
    %98 = vmatprep.subr.mxu0 0.0
    %99 = vmatpush1.msra.mxu0 0.0
    %100 = vmatprep.subr.mxu0 0.0
    %101 = vmatpush1.msra.mxu0 0.0
    %102 = vmatprep.subr.mxu0 0.0
    %103 = vmatpush1.msra.mxu0 0.0
    %104 = vmatprep.mubr.f32.mxu0 0.0
    %105 = vmatmul.mubr.f32.gmra.mrb[0].mxu0 %v38
    %v106 = vpop.f32.mrb[0].mxu0
    %v107 = vadd.f32 %v34, %v106
    %v108 = vpop.f32.mrb[0].mxu0
    %109 = vdwg.mxu0
    %110 = vst [vmem:[#allocation5] sm:$0xff] %v107
    // Predicated region
    $region18: #{tpu_custom_call.1} parent=1 // pred_check
      _
    $region19: #{tpu_custom_call.1} parent=1 // pred_check_branch
      %112 = sbr.rel (0) target = $region21
    $region20: #{tpu_custom_call.1} parent=1 // pred_region
      %s114 = ssub.s32 128, 128
      %115 = vsyncadd [#allocation4], %s114
      %s117 = sshll.u32 [#allocation5], 4
      %s118 = int_to_ptr.vmem [resolvable:$true] %s117
      %120 = dma.vmem_to_hbm [thread:$0]  %s118, 128, %s3, [#allocation4]
    $region21: #{tpu_custom_call.1} parent=1 // pred_fallthru
      _
    // Predicated region
    $region22: #{tpu_custom_call.1} parent=1 // pred_check
      _
    $region23: #{tpu_custom_call.1} parent=1 // pred_check_branch
      %122 = sbr.rel (0) target = $region25
    $region24: #{tpu_custom_call.1} parent=1 // pred_region
      %123 = dma.done [#allocation4], 128
    $region25: #{tpu_custom_call.1} parent=1 // pred_fallthru
      _
    %124 = vsyncpa [#allocation3], 1
    %125 = vsyncpa [#allocation4], 1

</llo_original>
